<compile_context>
chip_gen: v5e
topology: v5e:2x2
jax: 0.10.0
libtpu: 0.0.40
codegen_flags: <defaults>
</compile_context>

<pallas_src>
import functools
import math

import jax
import jax.numpy as jnp
from jax import lax
from jax.experimental import pallas as pl
from jax.experimental.pallas import tpu as pltpu


def _round_up(x, m):
    return (x + m - 1) // m * m


# ----------------------------- kernel 1: fused QKV projection -----------------

def _qkv_proj_kernel(x_ref, w_ref, b_ref, q_ref, k_ref, v_ref, *, d_pad):
    # x_ref: (tm, D_in) ; w_ref: (D_in, 3*d_pad) ; b_ref: (1, 3*d_pad)
    # Native-dtype operands into the MXU, f32 accumulation.
    qkv = jnp.dot(x_ref[...], w_ref[...], preferred_element_type=jnp.float32)
    qkv = qkv + b_ref[...].astype(jnp.float32)
    # 128-aligned static lane slices of the fused result.
    q_ref[...] = qkv[:, 0 * d_pad:1 * d_pad].astype(q_ref.dtype)
    k_ref[...] = qkv[:, 1 * d_pad:2 * d_pad].astype(k_ref.dtype)
    v_ref[...] = qkv[:, 2 * d_pad:3 * d_pad].astype(v_ref.dtype)


# ----------------------------- kernel 2: flash attention ----------------------

def _flash_attn_kernel(q_ref, k_ref, v_ref, o_ref, m_scr, l_scr, acc_scr, *,
                       scale, s_actual, tk, mask_keys, approx_recip):
    kv_idx = pl.program_id(2)

    @pl.when(kv_idx == 0)
    def _():
        m_scr[...] = jnp.full_like(m_scr, -jnp.inf)
        l_scr[...] = jnp.zeros_like(l_scr)
        acc_scr[...] = jnp.zeros_like(acc_scr)

    q = q_ref[...]                      # (tq, D_pad), native dtype
    k = k_ref[...]                      # (tk, D_pad), native dtype

    # q @ k^T with the contraction on the last dim of both operands
    # (no materialized transpose of k).
    s = lax.dot_general(q, k, dimension_numbers=(((1,), (1,)), ((), ())),
                        preferred_element_type=jnp.float32) * scale  # (tq, tk)

    if mask_keys:  # only emitted when the sequence was padded
        key_ids = kv_idx * tk + lax.broadcasted_iota(jnp.int32, s.shape, 1)
        s = jnp.where(key_ids < s_actual, s, -jnp.inf)

    # online softmax update
    m_prev = m_scr[...]
    m_new = jnp.maximum(m_prev, jnp.max(s, axis=-1, keepdims=True))
    alpha = jnp.exp(m_prev - m_new)
    p = jnp.exp(s - m_new)
    l_scr[...] = alpha * l_scr[...] + jnp.sum(p, axis=-1, keepdims=True)
    acc_scr[...] = alpha * acc_scr[...] + jnp.dot(
        p.astype(v_ref.dtype), v_ref[...], preferred_element_type=jnp.float32)
    m_scr[...] = m_new

    @pl.when(kv_idx == pl.num_programs(2) - 1)
    def _():
        inv_l = pl.reciprocal(l_scr[...], approx=approx_recip)
        o_ref[...] = (acc_scr[...] * inv_l).astype(o_ref.dtype)


# ----------------------------- wrapper ----------------------------------------

def attention_layer(x, wq, bq, wk, bk, wv, bv, *, approx_recip=True):
    """x: [B, S, D_in]; w*: [D_in, D_out]; b*: [D_out]. Returns [B, S, D_out]."""
    B, S, D_in = x.shape
    D_out = wq.shape[1]
    dtype = x.dtype

    D_pad = _round_up(D_out, 128)                 # lane-dense feature dim
    scale = 1.0 / math.sqrt(float(D_in))          # matches x.size(-1) ** 0.5

    # --- fused + padded QKV parameters -> single [D_in, 3*D_pad] weight -------
    def pad_w(w):
        return jnp.pad(w, ((0, 0), (0, D_pad - D_out)))

    def pad_b(b):
        return jnp.pad(b, (0, D_pad - D_out))

    w_qkv = jnp.concatenate([pad_w(wq), pad_w(wk), pad_w(wv)], axis=1).astype(dtype)
    b_qkv = jnp.concatenate([pad_b(bq), pad_b(bk), pad_b(bv)]
                            ).reshape(1, 3 * D_pad).astype(dtype)

    # --- kernel 1: fused QKV projection over flattened (B*S) rows -------------
    M = B * S
    tm = min(256, _round_up(M, 8))
    M_pad = _round_up(M, tm)
    x2 = x.reshape(M, D_in)
    if M_pad != M:
        x2 = jnp.pad(x2, ((0, M_pad - M), (0, 0)))

    q, k, v = pl.pallas_call(
        functools.partial(_qkv_proj_kernel, d_pad=D_pad),
        out_shape=tuple(jax.ShapeDtypeStruct((M_pad, D_pad), dtype)
                        for _ in range(3)),
        grid_spec=pltpu.PrefetchScalarGridSpec(
            num_scalar_prefetch=0,
            grid=(M_pad // tm,),
            in_specs=[
                pl.BlockSpec((tm, D_in), lambda i: (i, 0)),
                # grid-invariant weight/bias (double-buffered by the pipeline;
                # negligible VMEM at these sizes)
                pl.BlockSpec((D_in, 3 * D_pad), lambda i: (0, 0)),
                pl.BlockSpec((1, 3 * D_pad), lambda i: (0, 0)),
            ],
            out_specs=[pl.BlockSpec((tm, D_pad), lambda i: (i, 0))
                       for _ in range(3)],
        ),
        compiler_params=pltpu.CompilerParams(
            dimension_semantics=("parallel",)),
    )(x2, w_qkv, b_qkv)

    # --- reshape to [B, S_pad, D_pad] and pad the sequence dim ----------------
    s_tile = min(256, _round_up(S, 8))            # 256-row tiles feed the 256-wide MXU
    S_pad = _round_up(S, s_tile)

    def to_bsd(t):
        t = t[:M].reshape(B, S, D_pad)
        if S_pad != S:
            t = jnp.pad(t, ((0, 0), (0, S_pad - S), (0, 0)))
        return t

    q, k, v = to_bsd(q), to_bsd(k), to_bsd(v)

    # --- kernel 2: flash attention ---------------------------------------------
    tq = tk = s_tile
    out = pl.pallas_call(
        functools.partial(_flash_attn_kernel, scale=scale, s_actual=S, tk=tk,
                          mask_keys=(S_pad != S), approx_recip=approx_recip),
        out_shape=jax.ShapeDtypeStruct((B, S_pad, D_pad), dtype),
        grid_spec=pltpu.PrefetchScalarGridSpec(
            num_scalar_prefetch=0,
            grid=(B, S_pad // tq, S_pad // tk),
            in_specs=[
                pl.BlockSpec((None, tq, D_pad), lambda b, qi, ki: (b, qi, 0)),
                pl.BlockSpec((None, tk, D_pad), lambda b, qi, ki: (b, ki, 0)),
                pl.BlockSpec((None, tk, D_pad), lambda b, qi, ki: (b, ki, 0)),
            ],
            out_specs=pl.BlockSpec((None, tq, D_pad),
                                   lambda b, qi, ki: (b, qi, 0)),
            scratch_shapes=[
                pltpu.VMEM((tq, 1), jnp.float32),      # running max m
                pltpu.VMEM((tq, 1), jnp.float32),      # running sum l
                pltpu.VMEM((tq, D_pad), jnp.float32),  # output accumulator
            ],
        ),
        compiler_params=pltpu.CompilerParams(
            dimension_semantics=("parallel", "parallel", "arbitrary")),
    )(q, k, v)

    return out[:, :S, :D_out]


# ----------------------------- reference + test --------------------------------

def _reference(x, wq, bq, wk, bk, wv, bv):
    q = x @ wq + bq
    k = x @ wk + bk
    v = x @ wv + bv
    scores = jnp.einsum("bqd,bkd->bqk", q, k) / math.sqrt(x.shape[-1])
    w = jax.nn.softmax(scores, axis=-1)
    return jnp.einsum("bqk,bkd->bqd", w, v)


if __name__ == "__main__":
    B, S, D_in, D_out = 2, 8, 32, 32

    key = jax.random.PRNGKey(0)
    kx, kq, kbq, kk, kbk, kv, kbv = jax.random.split(key, 7)

    # deterministic parameter init (mimics PyTorch Linear uniform(-1/sqrt(in), 1/sqrt(in)))
    bound = 1.0 / math.sqrt(D_in)
    x = jax.random.normal(kx, (B, S, D_in), dtype=jnp.float32)
    wq = jax.random.uniform(kq, (D_in, D_out), jnp.float32, -bound, bound)
    bq = jax.random.uniform(kbq, (D_out,), jnp.float32, -bound, bound)
    wk = jax.random.uniform(kk, (D_in, D_out), jnp.float32, -bound, bound)
    bk = jax.random.uniform(kbk, (D_out,), jnp.float32, -bound, bound)
    wv = jax.random.uniform(kv, (D_in, D_out), jnp.float32, -bound, bound)
    bv = jax.random.uniform(kbv, (D_out,), jnp.float32, -bound, bound)

    ref = _reference(x, wq, bq, wk, bk, wv, bv)

    # fast path (approx EUP reciprocal)
    out = attention_layer(x, wq, bq, wk, bk, wv, bv, approx_recip=True)
    out = jax.block_until_ready(out)
    assert out.shape == (B, S, D_out)
    assert jnp.allclose(out, ref, atol=5e-3, rtol=5e-3), "mismatch (approx path)"

    # bit-accurate path (exact reciprocal) for tight verification
    out_exact = attention_layer(x, wq, bq, wk, bk, wv, bv, approx_recip=False)
    out_exact = jax.block_until_ready(out_exact)
    assert jnp.allclose(out_exact, ref, atol=2e-5, rtol=2e-5), "mismatch (exact path)"

    print("KERNEL_OK")
</pallas_src>

<mosaic_0001>
module attributes {stable_mosaic.version = 11 : i64} {
  func.func @_qkv_proj_kernel(%arg0: i32, %arg1: memref<16x32xf32, #tpu.memory_space<vmem>>, %arg2: memref<32x384xf32, #tpu.memory_space<vmem>>, %arg3: memref<1x384xf32, #tpu.memory_space<vmem>>, %arg4: memref<16x128xf32, #tpu.memory_space<vmem>>, %arg5: memref<16x128xf32, #tpu.memory_space<vmem>>, %arg6: memref<16x128xf32, #tpu.memory_space<vmem>>) attributes {dimension_semantics = [#tpu.dimension_semantics<parallel>], iteration_bounds = array<i64: 1>, scalar_prefetch = 0 : i64, scratch_operands = 0 : i64, tpu.core_type = #tpu.core_type<tc>, window_params = [{transform_indices = @transform_0, window_bounds = array<i64: 16, 32>}, {pipeline_mode = #tpu.pipeline_mode<synchronous>, transform_indices = @transform_1, window_bounds = array<i64: 32, 384>}, {pipeline_mode = #tpu.pipeline_mode<synchronous>, transform_indices = @transform_2, window_bounds = array<i64: 1, 384>}, {transform_indices = @transform_3, window_bounds = array<i64: 16, 128>}, {transform_indices = @transform_4, window_bounds = array<i64: 16, 128>}, {transform_indices = @transform_5, window_bounds = array<i64: 16, 128>}]} {
    %c0 = arith.constant 0 : index
    %c0_0 = arith.constant 0 : index
    %0 = vector.load %arg1[%c0, %c0_0] : memref<16x32xf32, #tpu.memory_space<vmem>>, vector<16x32xf32>
    %c0_1 = arith.constant 0 : index
    %c0_2 = arith.constant 0 : index
    %1 = vector.load %arg2[%c0_1, %c0_2] : memref<32x384xf32, #tpu.memory_space<vmem>>, vector<32x384xf32>
    %cst = arith.constant dense<0.000000e+00> : vector<16x384xf32>
    %2 = tpu.matmul %0, %1, %cst {dimension_numbers = #tpu.dot_dimension_numbers<[1], [0], [0], [1], [0, 0, 1, 1], [], []>} : vector<16x32xf32>, vector<32x384xf32>, vector<16x384xf32> -> vector<16x384xf32>
    %c0_3 = arith.constant 0 : index
    %c0_4 = arith.constant 0 : index
    %3 = vector.load %arg3[%c0_3, %c0_4] : memref<1x384xf32, #tpu.memory_space<vmem>>, vector<1x384xf32>
    %4 = vector.broadcast %3 : vector<1x384xf32> to vector<16x384xf32>
    %5 = arith.addf %2, %4 : vector<16x384xf32>
    %6 = vector.extract_strided_slice %5 {offsets = [0, 0], sizes = [16, 128], strides = [1, 1]} : vector<16x384xf32> to vector<16x128xf32>
    %c0_5 = arith.constant 0 : index
    %c0_6 = arith.constant 0 : index
    %7 = vector.load %arg4[%c0_5, %c0_6] : memref<16x128xf32, #tpu.memory_space<vmem>>, vector<16x128xf32>
    tpu.vector_store %arg4[%c0_5, %c0_6], %6 {strides = array<i32>} : memref<16x128xf32, #tpu.memory_space<vmem>>, vector<16x128xf32>,
    %8 = vector.extract_strided_slice %5 {offsets = [0, 128], sizes = [16, 128], strides = [1, 1]} : vector<16x384xf32> to vector<16x128xf32>
    %c0_7 = arith.constant 0 : index
    %c0_8 = arith.constant 0 : index
    %9 = vector.load %arg5[%c0_7, %c0_8] : memref<16x128xf32, #tpu.memory_space<vmem>>, vector<16x128xf32>
    tpu.vector_store %arg5[%c0_7, %c0_8], %8 {strides = array<i32>} : memref<16x128xf32, #tpu.memory_space<vmem>>, vector<16x128xf32>,
    %10 = vector.extract_strided_slice %5 {offsets = [0, 256], sizes = [16, 128], strides = [1, 1]} : vector<16x384xf32> to vector<16x128xf32>
    %c0_9 = arith.constant 0 : index
    %c0_10 = arith.constant 0 : index
    %11 = vector.load %arg6[%c0_9, %c0_10] : memref<16x128xf32, #tpu.memory_space<vmem>>, vector<16x128xf32>
    tpu.vector_store %arg6[%c0_9, %c0_10], %10 {strides = array<i32>} : memref<16x128xf32, #tpu.memory_space<vmem>>, vector<16x128xf32>,
    return
  }
  func.func @transform_0(%arg0: i32) -> (i32, i32) {
    %c0_i32 = arith.constant 0 : i32
    %c0_i32_0 = arith.constant 0 : i32
    return %arg0, %c0_i32 : i32, i32
  }
  func.func @transform_1(%arg0: i32) -> (i32, i32) {
    %c0_i32 = arith.constant 0 : i32
    %c0_i32_0 = arith.constant 0 : i32
    %c0_i32_1 = arith.constant 0 : i32
    return %c0_i32, %c0_i32_0 : i32, i32
  }
  func.func @transform_2(%arg0: i32) -> (i32, i32) {
    %c0_i32 = arith.constant 0 : i32
    %c0_i32_0 = arith.constant 0 : i32
    %c0_i32_1 = arith.constant 0 : i32
    return %c0_i32, %c0_i32_0 : i32, i32
  }
  func.func @transform_3(%arg0: i32) -> (i32, i32) {
    %c0_i32 = arith.constant 0 : i32
    %c0_i32_0 = arith.constant 0 : i32
    return %arg0, %c0_i32 : i32, i32
  }
  func.func @transform_4(%arg0: i32) -> (i32, i32) {
    %c0_i32 = arith.constant 0 : i32
    %c0_i32_0 = arith.constant 0 : i32
    return %arg0, %c0_i32 : i32, i32
  }
  func.func @transform_5(%arg0: i32) -> (i32, i32) {
    %c0_i32 = arith.constant 0 : i32
    %c0_i32_0 = arith.constant 0 : i32
    return %arg0, %c0_i32 : i32, i32
  }
}

</mosaic_0001>

<llo_original>
// kernel: tpu_custom_call.1
$region0: #{tpu_custom_call.1}
  #allocation0 [shape = 'u32[]', space=smem, size = 0x4, offset = 0x4, fixed_abs, tag = 'smem constant byte address 0x4 - core index']
  #allocation1 [shape = 'u32[72,128]{1,0:T(1,128)}', space=vmem, size = 0x9000, scoped, tag = 'internal scratch']
  %s0 = inlined_call_operand.hbm [shape: f32[16,32], index: 0, kind: input, shape index: {}]
  %s1 = inlined_call_operand.hbm [shape: f32[32,384], index: 1, kind: input, shape index: {}]
  %s2 = inlined_call_operand.hbm [shape: f32[1,384], index: 2, kind: input, shape index: {}]
  %s3 = inlined_call_operand.hbm [shape: f32[16,128], index: 3, kind: output, shape index: {0}]
  %s4 = inlined_call_operand.hbm [shape: f32[16,128], index: 4, kind: output, shape index: {1}]
  %s5 = inlined_call_operand.hbm [shape: f32[16,128], index: 5, kind: output, shape index: {2}]
  %6 = xla_tuple %s3, %s4, %s5
  %s7 = sld [smem:[#allocation0]]
  $region50: #{tpu_custom_call.1} parent=0
    _
  %s9 = ssub.s32 1, %s7
  %s10 = scalar_select 0, %s9, %s7
  $region1: #{tpu_custom_call.1} parent=0
    #allocation2 [shape = 'u8[8192]{0}', space=vmem, size = 0x2000, scoped, tag = 'input window, operand 0, single buffered']
    #allocation3 [shape = 's32[1]{0}', space=sflag, size = 0x4, scoped, tag = 'scoped memory for tpu_custom_call.1']
    #allocation4 [shape = 's32[1]{0}', space=sflag, size = 0x4, scoped, tag = 'scoped memory for tpu_custom_call.1']
    #allocation5 [shape = 'u8[49152]{0}', space=vmem, size = 0xc000, scoped, tag = 'input window, operand 1, single buffered']
    #allocation6 [shape = 's32[1]{0}', space=sflag, size = 0x4, scoped, tag = 'scoped memory for tpu_custom_call.1']
    #allocation7 [shape = 'u8[1536]{0}', space=vmem, size = 0x800, scoped, tag = 'input window, operand 2, single buffered']
    #allocation8 [shape = 'u8[8192]{0}', space=vmem, size = 0x2000, scoped, tag = 'output window, operand 0, single buffered']
    #allocation9 [shape = 'u8[8192]{0}', space=vmem, size = 0x2000, scoped, tag = 'output window, operand 1, single buffered']
    #allocation10 [shape = 's32[1]{0}', space=sflag, size = 0x4, scoped, tag = 'scoped memory for tpu_custom_call.1']
    #allocation11 [shape = 'u8[8192]{0}', space=vmem, size = 0x2000, scoped, tag = 'output window, operand 2, single buffered']
    %11 = vsyncpa [#allocation3], 0
    %12 = vsyncpa [#allocation6], 0
    %13 = vsyncpa [#allocation4], 0
    %14 = vsyncpa [#allocation10], 0
    // Predicated region
    $region2: #{tpu_custom_call.1} parent=1 // pred_check
      _
    $region3: #{tpu_custom_call.1} parent=1 // pred_check_branch
      %16 = sbr.rel (0) target = $region5
    $region4: #{tpu_custom_call.1} parent=1 // pred_region
      %18 = vsyncadd [#allocation3], 0
      %s19 = sshll.u32 %s0, 4
      %s20 = int_to_ptr.hbm [resolvable:$true] %s19
      %s21 = sshll.u32 [#allocation2], 4
      %s22 = int_to_ptr.vmem [resolvable:$true] %s21
      %27 = dma.hbm_to_vmem [thread:$0]  %s20, 256, %s22, [#allocation3], 128, 128, 8
    $region5: #{tpu_custom_call.1} parent=1 // pred_fallthru
      _
    // Predicated region
    $region6: #{tpu_custom_call.1} parent=1 // pred_check
      _
    $region7: #{tpu_custom_call.1} parent=1 // pred_check_branch
      %29 = sbr.rel (0) target = $region9
    $region8: #{tpu_custom_call.1} parent=1 // pred_region
      %31 = vsyncadd [#allocation6], 0
      %s32 = sshll.u32 %s1, 4
      %s33 = int_to_ptr.hbm [resolvable:$true] %s32
      %s34 = sshll.u32 [#allocation5], 4
      %s35 = int_to_ptr.vmem [resolvable:$true] %s34
      %40 = dma.hbm_to_vmem [thread:$0]  %s33, 1536, %s35, [#allocation6], 384, 384, 24
    $region9: #{tpu_custom_call.1} parent=1 // pred_fallthru
      _
    // Predicated region
    $region10: #{tpu_custom_call.1} parent=1 // pred_check
      _
    $region11: #{tpu_custom_call.1} parent=1 // pred_check_branch
      %42 = sbr.rel (0) target = $region13
    $region12: #{tpu_custom_call.1} parent=1 // pred_region
      %44 = vsyncadd [#allocation6], 0
      %s46 = sshll.u32 %s2, 4
      %s47 = int_to_ptr.hbm [resolvable:$true] %s46
      %s48 = sshll.u32 [#allocation7], 4
      %s49 = int_to_ptr.vmem [resolvable:$true] %s48
      %51 = dma.hbm_to_vmem [thread:$0]  %s47, 48, %s49, [#allocation6]
    $region13: #{tpu_custom_call.1} parent=1 // pred_fallthru
      _
    // Predicated region
    $region14: #{tpu_custom_call.1} parent=1 // pred_check
      _
    $region15: #{tpu_custom_call.1} parent=1 // pred_check_branch
      %53 = sbr.rel (0) target = $region17
    $region16: #{tpu_custom_call.1} parent=1 // pred_region
      %55 = dma.done [#allocation3], 256
    $region17: #{tpu_custom_call.1} parent=1 // pred_fallthru
      _
    // Predicated region
    $region18: #{tpu_custom_call.1} parent=1 // pred_check
      _
    $region19: #{tpu_custom_call.1} parent=1 // pred_check_branch
      %57 = sbr.rel (0) target = $region21
    $region20: #{tpu_custom_call.1} parent=1 // pred_region
      %59 = dma.done [#allocation6], 1536
    $region21: #{tpu_custom_call.1} parent=1 // pred_fallthru
      _
    // Predicated region
    $region22: #{tpu_custom_call.1} parent=1 // pred_check
      _
    $region23: #{tpu_custom_call.1} parent=1 // pred_check_branch
      %61 = sbr.rel (0) target = $region25
    $region24: #{tpu_custom_call.1} parent=1 // pred_region
      %63 = dma.done [#allocation6], 48
    $region25: #{tpu_custom_call.1} parent=1 // pred_fallthru
      _
    %v64 = vld [vmem:[#allocation2] sm:$0xff]
    %v65 = vld [vmem:[#allocation2 + $0x8] sm:$0xff]
    %v66 = vld [vmem:[#allocation5] sm:$0xff]
    %v67 = vld [vmem:[#allocation5 + $0x8] sm:$0xff]
    %v68 = vld [vmem:[#allocation5 + $0x10] sm:$0xff]
    %v69 = vld [vmem:[#allocation5 + $0x18] sm:$0xff]
    %v70 = vld [vmem:[#allocation5 + $0x20] sm:$0xff]
    %v71 = vld [vmem:[#allocation5 + $0x28] sm:$0xff]
    %v72 = vld [vmem:[#allocation5 + $0x30] sm:$0xff]
    %v73 = vld [vmem:[#allocation5 + $0x38] sm:$0xff]
    %v74 = vld [vmem:[#allocation5 + $0x40] sm:$0xff]
    %v75 = vld [vmem:[#allocation5 + $0x48] sm:$0xff]
    %v76 = vld [vmem:[#allocation5 + $0x50] sm:$0xff]
    %v77 = vld [vmem:[#allocation5 + $0x58] sm:$0xff]
    %v78 = vld [vmem:[#allocation7] sm:$0x7]
    %v80 = vperm.slane %v78, 0
    %v81 = vperm.slane %v78, 1
    %v82 = vperm.slane %v78, 2
    %vm86 = vcmask 261120
    %v88 = vsel %vm86, %v64, 0
    %v91 = vsel %vm86, %v65, 0
    %93 = vmatpush.msra.mxu0 0.0
    %94 = vmatpush.msra.mxu0 0.0
    %95 = vmatpush.msra.mxu0 0.0
    %96 = vmatpush.msra.mxu0 0.0
    %97 = vmatpush.msra.mxu0 0.0
    %98 = vmatpush.msra.mxu0 0.0
    %99 = vmatpush.msra.mxu0 0.0
    %100 = vmatpush.msra.mxu0 0.0
    %101 = vmatpush.msra.mxu0 0.0
    %102 = vmatpush.msra.mxu0 0.0
    %103 = vmatpush.msra.mxu0 0.0
    %104 = vmatpush.msra.mxu0 0.0
    %105 = vmatpush.msra.mxu0 %v75
    %106 = vmatpush.msra.mxu0 %v72
    %107 = vmatpush.msra.mxu0 %v69
    %108 = vmatpush.msra.mxu0 %v66
    %109 = vmatmul.f32.gmra.mxu0 %v88
    %v110 = vpop.f32.mrf.mxu0
    %v111 = vadd.f32 %v80, %v110
    %112 = vmatmul.f32.gmra.mxu0 %v91
    %v113 = vpop.f32.mrf.mxu0
    %v114 = vadd.f32 %v80, %v113
    %115 = vdwg.mxu0
    %116 = vmatpush.msra.mxu0 0.0
    %117 = vmatpush.msra.mxu0 0.0
    %118 = vmatpush.msra.mxu0 0.0
    %119 = vmatpush.msra.mxu0 0.0
    %120 = vmatpush.msra.mxu0 0.0
    %121 = vmatpush.msra.mxu0 0.0
    %122 = vmatpush.msra.mxu0 0.0
    %123 = vmatpush.msra.mxu0 0.0
    %124 = vmatpush.msra.mxu0 0.0
    %125 = vmatpush.msra.mxu0 0.0
    %126 = vmatpush.msra.mxu0 0.0
    %127 = vmatpush.msra.mxu0 0.0
    %128 = vmatpush.msra.mxu0 %v76
    %129 = vmatpush.msra.mxu0 %v73
    %130 = vmatpush.msra.mxu0 %v70
    %131 = vmatpush.msra.mxu0 %v67
    %132 = vmatmul.f32.gmra.mxu0 %v88
    %v133 = vpop.f32.mrf.mxu0
    %v134 = vadd.f32 %v81, %v133
    %135 = vmatmul.f32.gmra.mxu0 %v91
    %v136 = vpop.f32.mrf.mxu0
    %v137 = vadd.f32 %v81, %v136
    %138 = vdwg.mxu0
    %139 = vmatpush.msra.mxu0 0.0
    %140 = vmatpush.msra.mxu0 0.0
    %141 = vmatpush.msra.mxu0 0.0
    %142 = vmatpush.msra.mxu0 0.0
    %143 = vmatpush.msra.mxu0 0.0
    %144 = vmatpush.msra.mxu0 0.0
    %145 = vmatpush.msra.mxu0 0.0
    %146 = vmatpush.msra.mxu0 0.0
    %147 = vmatpush.msra.mxu0 0.0
    %148 = vmatpush.msra.mxu0 0.0
    %149 = vmatpush.msra.mxu0 0.0
    %150 = vmatpush.msra.mxu0 0.0
    %151 = vmatpush.msra.mxu0 %v77
    %152 = vmatpush.msra.mxu0 %v74
    %153 = vmatpush.msra.mxu0 %v71
    %154 = vmatpush.msra.mxu0 %v68
    %155 = vmatmul.f32.gmra.mxu0 %v88
    %v156 = vpop.f32.mrf.mxu0
    %v157 = vadd.f32 %v82, %v156
    %158 = vmatmul.f32.gmra.mxu0 %v91
    %v159 = vpop.f32.mrf.mxu0
    %v160 = vadd.f32 %v82, %v159
    %161 = vdwg.mxu0
    %162 = vst [vmem:[#allocation8] sm:$0xff] %v111
    %163 = vst [vmem:[#allocation8 + $0x8] sm:$0xff] %v114
    %164 = vst [vmem:[#allocation9] sm:$0xff] %v134
    %165 = vst [vmem:[#allocation9 + $0x8] sm:$0xff] %v137
    %166 = vst [vmem:[#allocation11] sm:$0xff] %v157
    %167 = vst [vmem:[#allocation11 + $0x8] sm:$0xff] %v160
    // Predicated region
    $region26: #{tpu_custom_call.1} parent=1 // pred_check
      _
    $region27: #{tpu_custom_call.1} parent=1 // pred_check_branch
      %169 = sbr.rel (0) target = $region29
    $region28: #{tpu_custom_call.1} parent=1 // pred_region
      %171 = vsyncadd [#allocation4], 0
      %s172 = sshll.u32 [#allocation8], 4
      %s173 = int_to_ptr.vmem [resolvable:$true] %s172
      %s174 = sshll.u32 %s3, 4
      %s175 = int_to_ptr.hbm [resolvable:$true] %s174
      %180 = dma.vmem_to_hbm [thread:$0]  %s173, 256, %s175, [#allocation4], 128, 128, 8
    $region29: #{tpu_custom_call.1} parent=1 // pred_fallthru
      _
    // Predicated region
    $region30: #{tpu_custom_call.1} parent=1 // pred_check
      _
    $region31: #{tpu_custom_call.1} parent=1 // pred_check_branch
      %182 = sbr.rel (0) target = $region33
    $region32: #{tpu_custom_call.1} parent=1 // pred_region
      %184 = vsyncadd [#allocation10], 0
      %s185 = sshll.u32 [#allocation9], 4
      %s186 = int_to_ptr.vmem [resolvable:$true] %s185
      %s187 = sshll.u32 %s4, 4
      %s188 = int_to_ptr.hbm [resolvable:$true] %s187
      %193 = dma.vmem_to_hbm [thread:$0]  %s186, 256, %s188, [#allocation10], 128, 128, 8
    $region33: #{tpu_custom_call.1} parent=1 // pred_fallthru
      _
    // Predicated region
    $region34: #{tpu_custom_call.1} parent=1 // pred_check
      _
    $region35: #{tpu_custom_call.1} parent=1 // pred_check_branch
      %195 = sbr.rel (0) target = $region37
    $region36: #{tpu_custom_call.1} parent=1 // pred_region
      %197 = vsyncadd [#allocation10], 0
      %s198 = sshll.u32 [#allocation11], 4
      %s199 = int_to_ptr.vmem [resolvable:$true] %s198
      %s200 = sshll.u32 %s5, 4
      %s201 = int_to_ptr.hbm [resolvable:$true] %s200
      %206 = dma.vmem_to_hbm [thread:$0]  %s199, 256, %s201, [#allocation10], 128, 128, 8
    $region37: #{tpu_custom_call.1} parent=1 // pred_fallthru
      _
    // Predicated region
    $region38: #{tpu_custom_call.1} parent=1 // pred_check
      _
    $region39: #{tpu_custom_call.1} parent=1 // pred_check_branch
      %208 = sbr.rel (0) target = $region41
    $region40: #{tpu_custom_call.1} parent=1 // pred_region
      %210 = dma.done [#allocation4], 256
    $region41: #{tpu_custom_call.1} parent=1 // pred_fallthru
      _
    // Predicated region
    $region42: #{tpu_custom_call.1} parent=1 // pred_check
      _
    $region43: #{tpu_custom_call.1} parent=1 // pred_check_branch
      %212 = sbr.rel (0) target = $region45
    $region44: #{tpu_custom_call.1} parent=1 // pred_region
      %214 = dma.done [#allocation10], 256
    $region45: #{tpu_custom_call.1} parent=1 // pred_fallthru
      _
    // Predicated region
    $region46: #{tpu_custom_call.1} parent=1 // pred_check
      _
    $region47: #{tpu_custom_call.1} parent=1 // pred_check_branch
      %216 = sbr.rel (0) target = $region49
    $region48: #{tpu_custom_call.1} parent=1 // pred_region
      %218 = dma.done [#allocation10], 256
    $region49: #{tpu_custom_call.1} parent=1 // pred_fallthru
      _
    %219 = vsyncpa [#allocation3], 1
    %220 = vsyncpa [#allocation6], 1
    %221 = vsyncpa [#allocation4], 1
    %222 = vsyncpa [#allocation10], 1

</llo_original>
